<compile_context>
chip_gen: v7x
topology: tpu7x:2x2x1
jax: 0.10.0
libtpu: 0.0.40
codegen_flags: <defaults>
</compile_context>

<pallas_src>
import functools

import jax
import jax.numpy as jnp
from jax.experimental import pallas as pl
from jax.experimental.pallas import tpu as pltpu


# ---------------------------------------------------------------------------
# Shared kernel helpers
# ---------------------------------------------------------------------------
def _pairwise_loss(yp_row_ref, yt_row_ref, yp_col_ref, yt_col_ref, margin):
    # (TM,1) - (1,Np) -> (TM,Np).  margin / 0.0 are weak Python scalars, so
    # the whole chain stays in the input dtype (f32 on v5e, bf16 on v6e/v7x).
    dp = yp_col_ref[...] - yp_row_ref[...]          # yhat_i - yhat_j
    dt = yt_col_ref[...] - yt_row_ref[...]          #    y_i -    y_j
    return jnp.maximum(margin - dp * dt, 0.0)


def _sublane_group_sum(x):
    # (TM, Np) -> (8, Np): tree-sum groups of 8 sublanes with static,
    # sublane-aligned slices (pure VALU adds, keeps the natural (8,128) vreg
    # layout, no per-step XLU reduce / masked 1-of-8 store).
    parts = [x[i:i + 8, :] for i in range(0, x.shape[0], 8)]
    while len(parts) > 1:
        nxt = [a + b for a, b in zip(parts[0::2], parts[1::2])]
        if len(parts) % 2:
            nxt.append(parts[-1])
        parts = nxt
    return parts[0]


def _finalize(acc_ref, col_mask_ref, out_ref, n, margin, inv_denom):
    # One-time epilogue: apply the column (padding) mask once, single
    # cross-lane reduce, subtract the diagonal analytically, normalize.
    total = jnp.sum(acc_ref[...] * col_mask_ref[...])
    # Diagonal (i == j, i < n) always contributes max(margin, 0) each.
    total = total - jnp.float32(n * max(float(margin), 0.0))
    out_ref[0, 0] = total * jnp.float32(inv_denom)


# ---------------------------------------------------------------------------
# f32 / VALU kernel (v5e and fallback)
# ---------------------------------------------------------------------------
def _rank_loss_kernel_f32(col_mask_ref, yp_row_ref, yt_row_ref,
                          yp_col_ref, yt_col_ref, row_mask_ref,
                          out_ref, acc_ref, *, n, margin, inv_denom, has_pad):
    t = pl.program_id(0)
    last = pl.num_programs(0) - 1

    @pl.when(t == 0)
    def _init():
        acc_ref[...] = jnp.zeros_like(acc_ref)

    loss = _pairwise_loss(yp_row_ref, yt_row_ref, yp_col_ref, yt_col_ref,
                          margin)                               # (TM, Np) f32

    if has_pad:
        # Padded rows only exist in the last row tile: pay the row-mask
        # multiply there and nowhere else.
        @pl.when(t != last)
        def _acc_unmasked():
            acc_ref[...] += _sublane_group_sum(loss)

        @pl.when(t == last)
        def _acc_masked():
            acc_ref[...] += _sublane_group_sum(loss * row_mask_ref[...])
    else:
        acc_ref[...] += _sublane_group_sum(loss)

    @pl.when(t == last)
    def _done():
        _finalize(acc_ref, col_mask_ref, out_ref, n, margin, inv_denom)


# ---------------------------------------------------------------------------
# bf16 / MXU-reduce kernel (v6e / v7x: bf16 VALU, MXU otherwise idle)
# ---------------------------------------------------------------------------
def _rank_loss_kernel_bf16(col_mask_ref, yp_row_ref, yt_row_ref,
                           reduce_w_ref, yp_col_ref, yt_col_ref,
                           out_ref, acc_ref, *, n, margin, inv_denom):
    t = pl.program_id(0)
    last = pl.num_programs(0) - 1

    @pl.when(t == 0)
    def _init():
        acc_ref[...] = jnp.zeros_like(acc_ref)

    loss = _pairwise_loss(yp_row_ref, yt_row_ref, yp_col_ref, yt_col_ref,
                          margin)                               # (TM, Np) bf16

    # Column-reduce the tile on the (idle) MXU with the row-validity mask
    # folded into the reduction weights: row 0 of reduce_w is the 0/1 row
    # mask, rows 1..15 are zero, so acc row 0 accumulates the row-masked
    # column sums in f32 (MXU accumulates in f32) and the other rows stay 0.
    acc_ref[...] += jnp.dot(reduce_w_ref[...], loss,
                            preferred_element_type=jnp.float32)

    @pl.when(t == last)
    def _done():
        _finalize(acc_ref, col_mask_ref, out_ref, n, margin, inv_denom)


# ---------------------------------------------------------------------------
# Wrapper
# ---------------------------------------------------------------------------
def _has_fast_bf16_valu():
    # bf16 VALU exists on v6e / v7x; NOT on v5e (or older).  Fall back to the
    # f32 path whenever the device kind cannot be identified.
    try:
        kind = jax.devices()[0].device_kind.lower()
    except Exception:
        return False
    if any(b in kind for b in ("v2", "v3", "v4", "v5")):
        return False
    return any(g in kind for g in ("v6", "v7", "7x"))


def _pick_tile_m(n_pad, itemsize):
    # ~4 live (TM, Np) elementwise intermediates; keep them <= ~24 MiB so the
    # working set (plus resident rows, the accumulator and double-buffered
    # (TM,1) inputs) stays well under the explicit 48 MiB scoped-VMEM limit
    # on every generation (v7x only has 64 MiB physical VMEM per core).
    budget = 24 * 1024 * 1024
    per_row = 4 * itemsize * n_pad
    for tm in (1024, 512, 256, 128):
        if n_pad % tm == 0 and tm * per_row <= budget:
            return tm
    # TODO(synk): for Np >~ 16K add a column tile axis instead of shrinking
    # TM below 128 (avoids flipping from VALU-bound to vector-store-bound).
    return 128


def rank_loss(y_pred, y_true, margin=0.2, use_bf16=None):
    """Pallas TPU equivalent of RankLoss.forward(yhat, y) -> scalar f32."""
    yp = jnp.ravel(y_pred).astype(jnp.float32)
    yt = jnp.ravel(y_true).astype(jnp.float32)
    n = int(yp.shape[0])
    assert n >= 2, "RankLoss needs at least 2 elements"

    if use_bf16 is None:
        use_bf16 = _has_fast_bf16_valu()
    compute_dtype = jnp.bfloat16 if use_bf16 else jnp.float32

    n_pad = ((n + 127) // 128) * 128            # pad lanes to a multiple of 128
    pad = n_pad - n
    tm = _pick_tile_m(n_pad, jnp.dtype(compute_dtype).itemsize)
    num_tiles = n_pad // tm

    yp_p = jnp.pad(yp, (0, pad)).astype(compute_dtype)
    yt_p = jnp.pad(yt, (0, pad)).astype(compute_dtype)
    valid = jnp.arange(n_pad) < n

    yp_row = yp_p.reshape(1, n_pad)             # resident row-broadcast operands
    yt_row = yt_p.reshape(1, n_pad)
    yp_col = yp_p.reshape(n_pad, 1)             # per-tile column operands
    yt_col = yt_p.reshape(n_pad, 1)
    col_mask = valid.astype(jnp.float32).reshape(1, n_pad)   # epilogue only

    # Exact divisor computed once in Python (f64/int), cast to f32 once.
    inv_denom = 1.0 / float(n * (n - 1))

    common = dict(n=n, margin=float(margin), inv_denom=inv_denom)
    row_specs = [
        pl.BlockSpec((1, n_pad), lambda t: (0, 0)),   # col_mask (resident)
        pl.BlockSpec((1, n_pad), lambda t: (0, 0)),   # yp_row   (resident)
        pl.BlockSpec((1, n_pad), lambda t: (0, 0)),   # yt_row   (resident)
    ]
    col_spec = pl.BlockSpec((tm, 1), lambda t: (t, 0))

    if use_bf16:
        # MXU reduce weights: row 0 = row-validity mask, rows 1..15 = 0
        # (16 rows = native bf16 sublane tile).
        acc_rows = 16
        reduce_w = jnp.zeros((acc_rows, n_pad), compute_dtype)
        reduce_w = reduce_w.at[0, :].set(valid.astype(compute_dtype))
        kernel = functools.partial(_rank_loss_kernel_bf16, **common)
        in_specs = row_specs + [
            pl.BlockSpec((acc_rows, tm), lambda t: (0, t)),   # reduce weights
            col_spec,                                         # yp_col tile
            col_spec,                                         # yt_col tile
        ]
        operands = (col_mask, yp_row, yt_row, reduce_w, yp_col, yt_col)
    else:
        acc_rows = 8
        row_mask = valid.astype(jnp.float32).reshape(n_pad, 1)
        kernel = functools.partial(_rank_loss_kernel_f32, has_pad=pad > 0,
                                   **common)
        in_specs = row_specs + [col_spec, col_spec, col_spec]
        operands = (col_mask, yp_row, yt_row, yp_col, yt_col, row_mask)

    out = pl.pallas_call(
        kernel,
        out_shape=jax.ShapeDtypeStruct((1, 1), jnp.float32),
        grid=(num_tiles,),
        in_specs=in_specs,
        out_specs=pl.BlockSpec(memory_space=pltpu.SMEM),
        scratch_shapes=[pltpu.VMEM((acc_rows, n_pad), jnp.float32)],
        compiler_params=pltpu.CompilerParams(
            dimension_semantics=("arbitrary",),
            vmem_limit_bytes=48 * 1024 * 1024),
    )(*operands)
    return out[0, 0]


# ---------------------------------------------------------------------------
# Pure-JAX reference (mirrors the PyTorch module exactly)
# ---------------------------------------------------------------------------
def _rank_loss_ref(y_pred, y_true, margin=0.2):
    yp = jnp.ravel(y_pred).astype(jnp.float32)
    yt = jnp.ravel(y_true).astype(jnp.float32)
    dp = yp[:, None] - yp[None, :]
    dt = yt[:, None] - yt[None, :]
    loss = jnp.maximum(margin - dp * dt, 0.0)
    n = yp.shape[0]
    mask = ~jnp.eye(n, dtype=bool)
    return jnp.sum(jnp.where(mask, loss, 0.0)) / jnp.float32(n * (n - 1))


if __name__ == "__main__":
    key = jax.random.PRNGKey(0)
    k1, k2, k3, k4 = jax.random.split(key, 4)

    use_bf16 = _has_fast_bf16_valu()
    # bf16 elementwise math (v6e/v7x) changes numerics slightly (partial sums
    # stay f32); use a correspondingly looser tolerance there.
    rtol, atol = ((2e-2, 2e-3) if use_bf16 else (1e-4, 1e-4))

    # Case 1: N = 128 (exact lane multiple, single tile, no padding).
    y_hat = jax.random.normal(k1, (16, 8), dtype=jnp.float32)
    y_true = jax.random.normal(k2, (16, 8), dtype=jnp.float32)
    out = jax.block_until_ready(rank_loss(y_hat, y_true, margin=0.2))
    ref = jax.block_until_ready(_rank_loss_ref(y_hat, y_true, margin=0.2))
    assert jnp.allclose(out, ref, rtol=rtol, atol=atol), (out, ref)

    # Case 2: N = 300 (lane padding + multi-tile accumulation + last-tile
    # row mask / diagonal correction).
    y_hat2 = jax.random.normal(k3, (15, 20), dtype=jnp.float32)
    y_true2 = jax.random.normal(k4, (15, 20), dtype=jnp.float32)
    out2 = jax.block_until_ready(rank_loss(y_hat2, y_true2, margin=0.2))
    ref2 = jax.block_until_ready(_rank_loss_ref(y_hat2, y_true2, margin=0.2))
    assert jnp.allclose(out2, ref2, rtol=rtol, atol=atol), (out2, ref2)

    print("KERNEL_OK")
</pallas_src>

<mosaic_0001>
module attributes {stable_mosaic.version = 11 : i64} {
  func.func @_rank_loss_kernel_f32(%arg0: i32, %arg1: memref<1x128xf32, #tpu.memory_space<vmem>>, %arg2: memref<1x128xf32, #tpu.memory_space<vmem>>, %arg3: memref<1x128xf32, #tpu.memory_space<vmem>>, %arg4: memref<128x1xf32, #tpu.memory_space<vmem>>, %arg5: memref<128x1xf32, #tpu.memory_space<vmem>>, %arg6: memref<128x1xf32, #tpu.memory_space<vmem>>, %arg7: memref<1x1xf32, #tpu.memory_space<smem>>, %arg8: memref<8x128xf32, #tpu.memory_space<vmem>>) attributes {dimension_semantics = [#tpu.dimension_semantics<arbitrary>], iteration_bounds = array<i64: 1>, scalar_prefetch = 0 : i64, scratch_operands = 1 : i64, tpu.core_type = #tpu.core_type<tc>, window_params = [{pipeline_mode = #tpu.pipeline_mode<synchronous>, transform_indices = @transform_0, window_bounds = array<i64: 1, 128>}, {pipeline_mode = #tpu.pipeline_mode<synchronous>, transform_indices = @transform_1, window_bounds = array<i64: 1, 128>}, {pipeline_mode = #tpu.pipeline_mode<synchronous>, transform_indices = @transform_2, window_bounds = array<i64: 1, 128>}, {transform_indices = @transform_3, window_bounds = array<i64: 128, 1>}, {transform_indices = @transform_4, window_bounds = array<i64: 128, 1>}, {transform_indices = @transform_5, window_bounds = array<i64: 128, 1>}, {transform_indices = @transform_6, window_bounds = array<i64: 1, 1>}]} {
    %c0_i32 = arith.constant 0 : i32
    %0 = arith.cmpi eq, %arg0, %c0_i32 : i32
    %1 = arith.extui %0 : i1 to i32
    %c0_i32_0 = arith.constant 0 : i32
    %2 = arith.cmpi ne, %1, %c0_i32_0 : i32
    scf.if %2 {
      %cst_15 = arith.constant 0.000000e+00 : f32
      %55 = vector.broadcast %cst_15 : f32 to vector<8x128xf32>
      %c0_16 = arith.constant 0 : index
      %c0_17 = arith.constant 0 : index
      %56 = vector.load %arg8[%c0_16, %c0_17] : memref<8x128xf32, #tpu.memory_space<vmem>>, vector<8x128xf32>
      tpu.vector_store %arg8[%c0_16, %c0_17], %55 {strides = array<i32>} : memref<8x128xf32, #tpu.memory_space<vmem>>, vector<8x128xf32>,
    } else {
    }
    %c0 = arith.constant 0 : index
    %c0_1 = arith.constant 0 : index
    %3 = vector.load %arg4[%c0, %c0_1] : memref<128x1xf32, #tpu.memory_space<vmem>>, vector<128x1xf32>
    %c0_2 = arith.constant 0 : index
    %c0_3 = arith.constant 0 : index
    %4 = vector.load %arg2[%c0_2, %c0_3] : memref<1x128xf32, #tpu.memory_space<vmem>>, vector<1x128xf32>
    %5 = vector.broadcast %3 : vector<128x1xf32> to vector<128x128xf32>
    %6 = vector.broadcast %4 : vector<1x128xf32> to vector<128x128xf32>
    %7 = arith.subf %5, %6 : vector<128x128xf32>
    %c0_4 = arith.constant 0 : index
    %c0_5 = arith.constant 0 : index
    %8 = vector.load %arg5[%c0_4, %c0_5] : memref<128x1xf32, #tpu.memory_space<vmem>>, vector<128x1xf32>
    %c0_6 = arith.constant 0 : index
    %c0_7 = arith.constant 0 : index
    %9 = vector.load %arg3[%c0_6, %c0_7] : memref<1x128xf32, #tpu.memory_space<vmem>>, vector<1x128xf32>
    %10 = vector.broadcast %8 : vector<128x1xf32> to vector<128x128xf32>
    %11 = vector.broadcast %9 : vector<1x128xf32> to vector<128x128xf32>
    %12 = arith.subf %10, %11 : vector<128x128xf32>
    %13 = arith.mulf %7, %12 : vector<128x128xf32>
    %cst = arith.constant 2.000000e-01 : f32
    %14 = vector.broadcast %cst : f32 to vector<128x128xf32>
    %15 = arith.subf %14, %13 : vector<128x128xf32>
    %cst_8 = arith.constant 0.000000e+00 : f32
    %16 = vector.broadcast %cst_8 : f32 to vector<128x128xf32>
    %17 = arith.maximumf %15, %16 : vector<128x128xf32>
    %c0_9 = arith.constant 0 : index
    %c0_10 = arith.constant 0 : index
    %18 = vector.load %arg8[%c0_9, %c0_10] : memref<8x128xf32, #tpu.memory_space<vmem>>, vector<8x128xf32>
    %19 = vector.extract_strided_slice %17 {offsets = [0, 0], sizes = [8, 128], strides = [1, 1]} : vector<128x128xf32> to vector<8x128xf32>
    %20 = vector.extract_strided_slice %17 {offsets = [8, 0], sizes = [8, 128], strides = [1, 1]} : vector<128x128xf32> to vector<8x128xf32>
    %21 = vector.extract_strided_slice %17 {offsets = [16, 0], sizes = [8, 128], strides = [1, 1]} : vector<128x128xf32> to vector<8x128xf32>
    %22 = vector.extract_strided_slice %17 {offsets = [24, 0], sizes = [8, 128], strides = [1, 1]} : vector<128x128xf32> to vector<8x128xf32>
    %23 = vector.extract_strided_slice %17 {offsets = [32, 0], sizes = [8, 128], strides = [1, 1]} : vector<128x128xf32> to vector<8x128xf32>
    %24 = vector.extract_strided_slice %17 {offsets = [40, 0], sizes = [8, 128], strides = [1, 1]} : vector<128x128xf32> to vector<8x128xf32>
    %25 = vector.extract_strided_slice %17 {offsets = [48, 0], sizes = [8, 128], strides = [1, 1]} : vector<128x128xf32> to vector<8x128xf32>
    %26 = vector.extract_strided_slice %17 {offsets = [56, 0], sizes = [8, 128], strides = [1, 1]} : vector<128x128xf32> to vector<8x128xf32>
    %27 = vector.extract_strided_slice %17 {offsets = [64, 0], sizes = [8, 128], strides = [1, 1]} : vector<128x128xf32> to vector<8x128xf32>
    %28 = vector.extract_strided_slice %17 {offsets = [72, 0], sizes = [8, 128], strides = [1, 1]} : vector<128x128xf32> to vector<8x128xf32>
    %29 = vector.extract_strided_slice %17 {offsets = [80, 0], sizes = [8, 128], strides = [1, 1]} : vector<128x128xf32> to vector<8x128xf32>
    %30 = vector.extract_strided_slice %17 {offsets = [88, 0], sizes = [8, 128], strides = [1, 1]} : vector<128x128xf32> to vector<8x128xf32>
    %31 = vector.extract_strided_slice %17 {offsets = [96, 0], sizes = [8, 128], strides = [1, 1]} : vector<128x128xf32> to vector<8x128xf32>
    %32 = vector.extract_strided_slice %17 {offsets = [104, 0], sizes = [8, 128], strides = [1, 1]} : vector<128x128xf32> to vector<8x128xf32>
    %33 = vector.extract_strided_slice %17 {offsets = [112, 0], sizes = [8, 128], strides = [1, 1]} : vector<128x128xf32> to vector<8x128xf32>
    %34 = vector.extract_strided_slice %17 {offsets = [120, 0], sizes = [8, 128], strides = [1, 1]} : vector<128x128xf32> to vector<8x128xf32>
    %35 = arith.addf %19, %20 : vector<8x128xf32>
    %36 = arith.addf %21, %22 : vector<8x128xf32>
    %37 = arith.addf %23, %24 : vector<8x128xf32>
    %38 = arith.addf %25, %26 : vector<8x128xf32>
    %39 = arith.addf %27, %28 : vector<8x128xf32>
    %40 = arith.addf %29, %30 : vector<8x128xf32>
    %41 = arith.addf %31, %32 : vector<8x128xf32>
    %42 = arith.addf %33, %34 : vector<8x128xf32>
    %43 = arith.addf %35, %36 : vector<8x128xf32>
    %44 = arith.addf %37, %38 : vector<8x128xf32>
    %45 = arith.addf %39, %40 : vector<8x128xf32>
    %46 = arith.addf %41, %42 : vector<8x128xf32>
    %47 = arith.addf %43, %44 : vector<8x128xf32>
    %48 = arith.addf %45, %46 : vector<8x128xf32>
    %49 = arith.addf %47, %48 : vector<8x128xf32>
    %50 = arith.addf %18, %49 : vector<8x128xf32>
    %c0_11 = arith.constant 0 : index
    %c0_12 = arith.constant 0 : index
    %51 = vector.load %arg8[%c0_11, %c0_12] : memref<8x128xf32, #tpu.memory_space<vmem>>, vector<8x128xf32>
    tpu.vector_store %arg8[%c0_11, %c0_12], %50 {strides = array<i32>} : memref<8x128xf32, #tpu.memory_space<vmem>>, vector<8x128xf32>,
    %c0_i32_13 = arith.constant 0 : i32
    %52 = arith.cmpi eq, %arg0, %c0_i32_13 : i32
    %53 = arith.extui %52 : i1 to i32
    %c0_i32_14 = arith.constant 0 : i32
    %54 = arith.cmpi ne, %53, %c0_i32_14 : i32
    scf.if %54 {
      %c0_15 = arith.constant 0 : index
      %c0_16 = arith.constant 0 : index
      %55 = vector.load %arg8[%c0_15, %c0_16] : memref<8x128xf32, #tpu.memory_space<vmem>>, vector<8x128xf32>
      %c0_17 = arith.constant 0 : index
      %c0_18 = arith.constant 0 : index
      %56 = vector.load %arg1[%c0_17, %c0_18] : memref<1x128xf32, #tpu.memory_space<vmem>>, vector<1x128xf32>
      %57 = vector.broadcast %56 : vector<1x128xf32> to vector<8x128xf32>
      %58 = arith.mulf %55, %57 : vector<8x128xf32>
      %59 = vector.shape_cast %58 : vector<8x128xf32> to vector<1x8x128xf32>
      %cst_19 = arith.constant dense<0.000000e+00> : vector<1xf32>
      %60 = vector.multi_reduction <add>, %59, %cst_19 [1, 2] : vector<1x8x128xf32> to vector<1xf32>
      %61 = vector.shape_cast %60 : vector<1xf32> to vector<1x1x1xf32>
      %62 = vector.extract %61[0, 0, 0] : f32 from vector<1x1x1xf32>
      %cst_20 = arith.constant 2.560000e+01 : f32
      %63 = arith.subf %62, %cst_20 : f32
      %cst_21 = arith.constant 6.15157478E-5 : f32
      %64 = arith.mulf %63, %cst_21 : f32
      %c0_22 = arith.constant 0 : index
      %c0_23 = arith.constant 0 : index
      %65 = memref.load %arg7[%c0_22, %c0_23] : memref<1x1xf32, #tpu.memory_space<smem>>
      memref.store %64, %arg7[%c0_22, %c0_23] : memref<1x1xf32, #tpu.memory_space<smem>>
    } else {
    }
    return
  }
  func.func @transform_0(%arg0: i32) -> (i32, i32) {
    %c0_i32 = arith.constant 0 : i32
    %c0_i32_0 = arith.constant 0 : i32
    %c0_i32_1 = arith.constant 0 : i32
    return %c0_i32, %c0_i32_0 : i32, i32
  }
  func.func @transform_1(%arg0: i32) -> (i32, i32) {
    %c0_i32 = arith.constant 0 : i32
    %c0_i32_0 = arith.constant 0 : i32
    %c0_i32_1 = arith.constant 0 : i32
    return %c0_i32, %c0_i32_0 : i32, i32
  }
  func.func @transform_2(%arg0: i32) -> (i32, i32) {
    %c0_i32 = arith.constant 0 : i32
    %c0_i32_0 = arith.constant 0 : i32
    %c0_i32_1 = arith.constant 0 : i32
    return %c0_i32, %c0_i32_0 : i32, i32
  }
  func.func @transform_3(%arg0: i32) -> (i32, i32) {
    %c0_i32 = arith.constant 0 : i32
    %c0_i32_0 = arith.constant 0 : i32
    return %arg0, %c0_i32 : i32, i32
  }
  func.func @transform_4(%arg0: i32) -> (i32, i32) {
    %c0_i32 = arith.constant 0 : i32
    %c0_i32_0 = arith.constant 0 : i32
    return %arg0, %c0_i32 : i32, i32
  }
  func.func @transform_5(%arg0: i32) -> (i32, i32) {
    %c0_i32 = arith.constant 0 : i32
    %c0_i32_0 = arith.constant 0 : i32
    return %arg0, %c0_i32 : i32, i32
  }
  func.func @transform_6(%arg0: i32) -> (i32, i32) {
    %c0_i32 = arith.constant 0 : i32
    %c0_i32_0 = arith.constant 0 : i32
    %c0_i32_1 = arith.constant 0 : i32
    return %c0_i32, %c0_i32_0 : i32, i32
  }
}

</mosaic_0001>

<llo_original>
// kernel: tpu_custom_call.1
$region0: #{tpu_custom_call.1}
  #allocation0 [shape = 'u32[]', space=smem, size = 0x4, offset = 0x4, fixed_abs, tag = 'smem constant byte address 0x4 - core index']
  #allocation1 [shape = 'u32[144,128]{1,0:T(1,128)}', space=vmem, size = 0x12000, scoped, tag = 'internal scratch']
  #allocation2 [shape = 'f32[8,128]{1,0:T(8,128)}', space=vmem, size = 0x1000, scoped, tag = 'scratch operand']
  %s0 = inlined_call_operand.vmem [shape: f32[1,128], index: 0, kind: input, shape index: {}]
  %s1 = inlined_call_operand.vmem [shape: f32[1,128], index: 1, kind: input, shape index: {}]
  %s2 = inlined_call_operand.vmem [shape: f32[1,128], index: 2, kind: input, shape index: {}]
  %s3 = inlined_call_operand.vmem [shape: f32[128,1], index: 3, kind: input, shape index: {}]
  %s4 = inlined_call_operand.vmem [shape: f32[128,1], index: 4, kind: input, shape index: {}]
  %s5 = inlined_call_operand.vmem [shape: f32[128,1], index: 5, kind: input, shape index: {}]
  %s6 = inlined_call_operand.hbm [shape: f32[1,1], index: 6, kind: output, shape index: {}]
  %s7 = sld [smem:[#allocation0]]
  $region42: #{tpu_custom_call.1} parent=0
    _
  %s9 = ssub.s32 1, %s7
  %s10 = scalar_select 0, %s9, %s7
  $region1: #{tpu_custom_call.1} parent=0
    #allocation3 [shape = 'u8[512]{0}', space=smem, size = 0x200, scoped, tag = 'output window, operand 0, single buffered']
    #allocation4 [shape = 's32[1]{0}', space=sflag, size = 0x4, scoped, tag = 'scoped memory for tpu_custom_call.1']
    %11 = vsyncpa [#allocation4], 0
    // Predicated region
    $region2: #{tpu_custom_call.1} parent=1 // pred_check
      _
    $region3: #{tpu_custom_call.1} parent=1 // pred_check_branch
      %13 = sbr.rel (0) target = $region5
    $region4: #{tpu_custom_call.1} parent=1 // pred_region
      _
    $region5: #{tpu_custom_call.1} parent=1 // pred_fallthru
      _
    // Predicated region
    $region6: #{tpu_custom_call.1} parent=1 // pred_check
      _
    $region7: #{tpu_custom_call.1} parent=1 // pred_check_branch
      %15 = sbr.rel (0) target = $region9
    $region8: #{tpu_custom_call.1} parent=1 // pred_region
      _
    $region9: #{tpu_custom_call.1} parent=1 // pred_fallthru
      _
    // Predicated region
    $region10: #{tpu_custom_call.1} parent=1 // pred_check
      _
    $region11: #{tpu_custom_call.1} parent=1 // pred_check_branch
      %17 = sbr.rel (0) target = $region13
    $region12: #{tpu_custom_call.1} parent=1 // pred_region
      _
    $region13: #{tpu_custom_call.1} parent=1 // pred_fallthru
      _
    // Predicated region
    $region14: #{tpu_custom_call.1} parent=1 // pred_check
      _
    $region15: #{tpu_custom_call.1} parent=1 // pred_check_branch
      %19 = sbr.rel (0) target = $region17
    $region16: #{tpu_custom_call.1} parent=1 // pred_region
      _
    $region17: #{tpu_custom_call.1} parent=1 // pred_fallthru
      _
    // Predicated region
    $region18: #{tpu_custom_call.1} parent=1 // pred_check
      _
    $region19: #{tpu_custom_call.1} parent=1 // pred_check_branch
      %21 = sbr.rel (0) target = $region21
    $region20: #{tpu_custom_call.1} parent=1 // pred_region
      _
    $region21: #{tpu_custom_call.1} parent=1 // pred_fallthru
      _
    // Predicated region
    $region22: #{tpu_custom_call.1} parent=1 // pred_check
      _
    $region23: #{tpu_custom_call.1} parent=1 // pred_check_branch
      %23 = sbr.rel (0) target = $region25
    $region24: #{tpu_custom_call.1} parent=1 // pred_region
      _
    $region25: #{tpu_custom_call.1} parent=1 // pred_fallthru
      _
    %p24 = scmp.eq.s32.totalorder 0, 0
    // Predicated region
    $region26: #{tpu_custom_call.1} parent=1 // pred_check
      %p25 = pneg %p24
    $region27: #{tpu_custom_call.1} parent=1 // pred_check_branch
      %27 = sbr.rel (%p25) target = $region29
    $region28: #{tpu_custom_call.1} parent=1 // pred_region
      %28 = vst [vmem:[#allocation2] sm:$0xff] 0.0
    $region29: #{tpu_custom_call.1} parent=1 // pred_fallthru
      _
    %v29 = vld [vmem:[%s3] sm:$0xff]
    %v30 = vld [vmem:[%s3 + $0x8] sm:$0xff]
    %v31 = vld [vmem:[%s3 + $0x10] sm:$0xff]
    %v32 = vld [vmem:[%s3 + $0x18] sm:$0xff]
    %v33 = vld [vmem:[%s3 + $0x20] sm:$0xff]
    %v34 = vld [vmem:[%s3 + $0x28] sm:$0xff]
    %v35 = vld [vmem:[%s3 + $0x30] sm:$0xff]
    %v36 = vld [vmem:[%s3 + $0x38] sm:$0xff]
    %v37 = vld [vmem:[%s3 + $0x40] sm:$0xff]
    %v38 = vld [vmem:[%s3 + $0x48] sm:$0xff]
    %v39 = vld [vmem:[%s3 + $0x50] sm:$0xff]
    %v40 = vld [vmem:[%s3 + $0x58] sm:$0xff]
    %v41 = vld [vmem:[%s3 + $0x60] sm:$0xff]
    %v42 = vld [vmem:[%s3 + $0x68] sm:$0xff]
    %v43 = vld [vmem:[%s3 + $0x70] sm:$0xff]
    %v44 = vld [vmem:[%s3 + $0x78] sm:$0xff]
    %v45 = vld [vmem:[%s1] sm:$0x1]
    %47 = vset.pattern.permute.xlu0 0
    %48 = vperm.xlu0 %47, %v29
    %v49 = vpop.permute.xlu0 %48
    %52 = vset.pattern.permute.xlu0 0
    %53 = vperm.xlu0 %52, %v30
    %v54 = vpop.permute.xlu0 %53
    %57 = vset.pattern.permute.xlu0 0
    %58 = vperm.xlu0 %57, %v31
    %v59 = vpop.permute.xlu0 %58
    %62 = vset.pattern.permute.xlu0 0
    %63 = vperm.xlu0 %62, %v32
    %v64 = vpop.permute.xlu0 %63
    %67 = vset.pattern.permute.xlu0 0
    %68 = vperm.xlu0 %67, %v33
    %v69 = vpop.permute.xlu0 %68
    %72 = vset.pattern.permute.xlu0 0
    %73 = vperm.xlu0 %72, %v34
    %v74 = vpop.permute.xlu0 %73
    %77 = vset.pattern.permute.xlu0 0
    %78 = vperm.xlu0 %77, %v35
    %v79 = vpop.permute.xlu0 %78
    %82 = vset.pattern.permute.xlu0 0
    %83 = vperm.xlu0 %82, %v36
    %v84 = vpop.permute.xlu0 %83
    %87 = vset.pattern.permute.xlu0 0
    %88 = vperm.xlu0 %87, %v37
    %v89 = vpop.permute.xlu0 %88
    %92 = vset.pattern.permute.xlu0 0
    %93 = vperm.xlu0 %92, %v38
    %v94 = vpop.permute.xlu0 %93
    %97 = vset.pattern.permute.xlu0 0
    %98 = vperm.xlu0 %97, %v39
    %v99 = vpop.permute.xlu0 %98
    %102 = vset.pattern.permute.xlu0 0
    %103 = vperm.xlu0 %102, %v40
    %v104 = vpop.permute.xlu0 %103
    %107 = vset.pattern.permute.xlu0 0
    %108 = vperm.xlu0 %107, %v41
    %v109 = vpop.permute.xlu0 %108
    %112 = vset.pattern.permute.xlu0 0
    %113 = vperm.xlu0 %112, %v42
    %v114 = vpop.permute.xlu0 %113
    %117 = vset.pattern.permute.xlu0 0
    %118 = vperm.xlu0 %117, %v43
    %v119 = vpop.permute.xlu0 %118
    %122 = vset.pattern.permute.xlu0 0
    %123 = vperm.xlu0 %122, %v44
    %v124 = vpop.permute.xlu0 %123
    %v127 = vlaneseq
    %v128 = vshrl.u32 %v127, 7
    %v129 = vsub.s32 0, %v128
    %v130 = vrot.slane %v45, %v129
    %v132 = vsub.f32 %v49, %v130
    %v133 = vsub.f32 %v54, %v130
    %v134 = vsub.f32 %v59, %v130
    %v135 = vsub.f32 %v64, %v130
    %v136 = vsub.f32 %v69, %v130
    %v137 = vsub.f32 %v74, %v130
    %v138 = vsub.f32 %v79, %v130
    %v139 = vsub.f32 %v84, %v130
    %v140 = vsub.f32 %v89, %v130
    %v141 = vsub.f32 %v94, %v130
    %v142 = vsub.f32 %v99, %v130
    %v143 = vsub.f32 %v104, %v130
    %v144 = vsub.f32 %v109, %v130
    %v145 = vsub.f32 %v114, %v130
    %v146 = vsub.f32 %v119, %v130
    %v147 = vsub.f32 %v124, %v130
    %v148 = vld [vmem:[%s4] sm:$0xff]
    %v149 = vld [vmem:[%s4 + $0x8] sm:$0xff]
    %v150 = vld [vmem:[%s4 + $0x10] sm:$0xff]
    %v151 = vld [vmem:[%s4 + $0x18] sm:$0xff]
    %v152 = vld [vmem:[%s4 + $0x20] sm:$0xff]
    %v153 = vld [vmem:[%s4 + $0x28] sm:$0xff]
    %v154 = vld [vmem:[%s4 + $0x30] sm:$0xff]
    %v155 = vld [vmem:[%s4 + $0x38] sm:$0xff]
    %v156 = vld [vmem:[%s4 + $0x40] sm:$0xff]
    %v157 = vld [vmem:[%s4 + $0x48] sm:$0xff]
    %v158 = vld [vmem:[%s4 + $0x50] sm:$0xff]
    %v159 = vld [vmem:[%s4 + $0x58] sm:$0xff]
    %v160 = vld [vmem:[%s4 + $0x60] sm:$0xff]
    %v161 = vld [vmem:[%s4 + $0x68] sm:$0xff]
    %v162 = vld [vmem:[%s4 + $0x70] sm:$0xff]
    %v163 = vld [vmem:[%s4 + $0x78] sm:$0xff]
    %v164 = vld [vmem:[%s2] sm:$0x1]
    %166 = vset.pattern.permute.xlu0 0
    %167 = vperm.xlu0 %166, %v148
    %v168 = vpop.permute.xlu0 %167
    %171 = vset.pattern.permute.xlu0 0
    %172 = vperm.xlu0 %171, %v149
    %v173 = vpop.permute.xlu0 %172
    %176 = vset.pattern.permute.xlu0 0
    %177 = vperm.xlu0 %176, %v150
    %v178 = vpop.permute.xlu0 %177
    %181 = vset.pattern.permute.xlu0 0
    %182 = vperm.xlu0 %181, %v151
    %v183 = vpop.permute.xlu0 %182
    %186 = vset.pattern.permute.xlu0 0
    %187 = vperm.xlu0 %186, %v152
    %v188 = vpop.permute.xlu0 %187
    %191 = vset.pattern.permute.xlu0 0
    %192 = vperm.xlu0 %191, %v153
    %v193 = vpop.permute.xlu0 %192
    %196 = vset.pattern.permute.xlu0 0
    %197 = vperm.xlu0 %196, %v154
    %v198 = vpop.permute.xlu0 %197
    %201 = vset.pattern.permute.xlu0 0
    %202 = vperm.xlu0 %201, %v155
    %v203 = vpop.permute.xlu0 %202
    %206 = vset.pattern.permute.xlu0 0
    %207 = vperm.xlu0 %206, %v156
    %v208 = vpop.permute.xlu0 %207
    %211 = vset.pattern.permute.xlu0 0
    %212 = vperm.xlu0 %211, %v157
    %v213 = vpop.permute.xlu0 %212
    %216 = vset.pattern.permute.xlu0 0
    %217 = vperm.xlu0 %216, %v158
    %v218 = vpop.permute.xlu0 %217
    %221 = vset.pattern.permute.xlu0 0
    %222 = vperm.xlu0 %221, %v159
    %v223 = vpop.permute.xlu0 %222
    %226 = vset.pattern.permute.xlu0 0
    %227 = vperm.xlu0 %226, %v160
    %v228 = vpop.permute.xlu0 %227
    %231 = vset.pattern.permute.xlu0 0
    %232 = vperm.xlu0 %231, %v161
    %v233 = vpop.permute.xlu0 %232
    %236 = vset.pattern.permute.xlu0 0
    %237 = vperm.xlu0 %236, %v162
    %v238 = vpop.permute.xlu0 %237
    %241 = vset.pattern.permute.xlu0 0
    %242 = vperm.xlu0 %241, %v163
    %v243 = vpop.permute.xlu0 %242
    %v246 = vlaneseq
    %v247 = vshrl.u32 %v246, 7
    %v248 = vsub.s32 0, %v247
    %v249 = vrot.slane %v164, %v248
    %v251 = vsub.f32 %v168, %v249
    %v252 = vsub.f32 %v173, %v249
    %v253 = vsub.f32 %v178, %v249
    %v254 = vsub.f32 %v183, %v249
    %v255 = vsub.f32 %v188, %v249
    %v256 = vsub.f32 %v193, %v249
    %v257 = vsub.f32 %v198, %v249
    %v258 = vsub.f32 %v203, %v249
    %v259 = vsub.f32 %v208, %v249
    %v260 = vsub.f32 %v213, %v249
    %v261 = vsub.f32 %v218, %v249
    %v262 = vsub.f32 %v223, %v249
    %v263 = vsub.f32 %v228, %v249
    %v264 = vsub.f32 %v233, %v249
    %v265 = vsub.f32 %v238, %v249
    %v266 = vsub.f32 %v243, %v249
    %v267 = vmul.f32 %v132, %v251
    %v268 = vmul.f32 %v133, %v252
    %v269 = vmul.f32 %v134, %v253
    %v270 = vmul.f32 %v135, %v254
    %v271 = vmul.f32 %v136, %v255
    %v272 = vmul.f32 %v137, %v256
    %v273 = vmul.f32 %v138, %v257
    %v274 = vmul.f32 %v139, %v258
    %v275 = vmul.f32 %v140, %v259
    %v276 = vmul.f32 %v141, %v260
    %v277 = vmul.f32 %v142, %v261
    %v278 = vmul.f32 %v143, %v262
    %v279 = vmul.f32 %v144, %v263
    %v280 = vmul.f32 %v145, %v264
    %v281 = vmul.f32 %v146, %v265
    %v282 = vmul.f32 %v147, %v266
    %v283 = vsub.f32 0.2, %v267
    %v284 = vsub.f32 0.2, %v268
    %v285 = vsub.f32 0.2, %v269
    %v286 = vsub.f32 0.2, %v270
    %v287 = vsub.f32 0.2, %v271
    %v288 = vsub.f32 0.2, %v272
    %v289 = vsub.f32 0.2, %v273
    %v290 = vsub.f32 0.2, %v274
    %v291 = vsub.f32 0.2, %v275
    %v292 = vsub.f32 0.2, %v276
    %v293 = vsub.f32 0.2, %v277
    %v294 = vsub.f32 0.2, %v278
    %v295 = vsub.f32 0.2, %v279
    %v296 = vsub.f32 0.2, %v280
    %v297 = vsub.f32 0.2, %v281
    %v298 = vsub.f32 0.2, %v282
    %v299 = vmax.f32 %v283, 0.0
    %v300 = vmax.f32 %v284, 0.0
    %v301 = vmax.f32 %v285, 0.0
    %v302 = vmax.f32 %v286, 0.0
    %v303 = vmax.f32 %v287, 0.0
    %v304 = vmax.f32 %v288, 0.0
    %v305 = vmax.f32 %v289, 0.0
    %v306 = vmax.f32 %v290, 0.0
    %v307 = vmax.f32 %v291, 0.0
    %v308 = vmax.f32 %v292, 0.0
    %v309 = vmax.f32 %v293, 0.0
    %v310 = vmax.f32 %v294, 0.0
    %v311 = vmax.f32 %v295, 0.0
    %v312 = vmax.f32 %v296, 0.0
    %v313 = vmax.f32 %v297, 0.0
    %v314 = vmax.f32 %v298, 0.0
    %v315 = vld [vmem:[#allocation2] sm:$0xff]
    %v316 = vadd.f32 %v299, %v300
    %v317 = vadd.f32 %v301, %v302
    %v318 = vadd.f32 %v303, %v304
    %v319 = vadd.f32 %v305, %v306
    %v320 = vadd.f32 %v307, %v308
    %v321 = vadd.f32 %v309, %v310
    %v322 = vadd.f32 %v311, %v312
    %v323 = vadd.f32 %v313, %v314
    %v324 = vadd.f32 %v316, %v317
    %v325 = vadd.f32 %v318, %v319
    %v326 = vadd.f32 %v320, %v321
    %v327 = vadd.f32 %v322, %v323
    %v328 = vadd.f32 %v324, %v325
    %v329 = vadd.f32 %v326, %v327
    %v330 = vadd.f32 %v328, %v329
    %v331 = vadd.f32 %v315, %v330
    %332 = vst [vmem:[#allocation2] sm:$0xff] %v331
    // Predicated region
    $region30: #{tpu_custom_call.1} parent=1 // pred_check
      %p333 = pneg %p24
    $region31: #{tpu_custom_call.1} parent=1 // pred_check_branch
      %335 = sbr.rel (%p333) target = $region33
    $region32: #{tpu_custom_call.1} parent=1 // pred_region
      %v336 = vld [vmem:[#allocation2] sm:$0xff]
      %v337 = vld [vmem:[%s0] sm:$0x1]
      %v339 = vlaneseq
      %v340 = vshrl.u32 %v339, 7
      %v341 = vsub.s32 0, %v340
      %v342 = vrot.slane %v337, %v341
      %v344 = vmul.f32 %v336, %v342
      %345 = vadd.xlane.f32.xlu0 %v344
      %v346 = vpop.xlane.xlu0 %345
      %v347 = vrot.slane %v346, 4
      %v348 = vadd.f32 %v346, %v347
      %v349 = vrot.slane %v348, 2
      %v350 = vadd.f32 %v348, %v349
      %v351 = vrot.slane %v350, 1
      %v352 = vadd.f32 %v350, %v351
      %s353 = vtos %v352
      %s354 = ssub.f32 %s353, 25.6
      %s355 = smul.f32 %s354, 6.151575e-05
      %s356 = scalar_lea.smem [#allocation3], 0
      %357 = sst [smem:[%s356]] %s355
    $region33: #{tpu_custom_call.1} parent=1 // pred_fallthru
      _
    // Predicated region
    $region34: #{tpu_custom_call.1} parent=1 // pred_check
      _
    $region35: #{tpu_custom_call.1} parent=1 // pred_check_branch
      %359 = sbr.rel (0) target = $region37
    $region36: #{tpu_custom_call.1} parent=1 // pred_region
      %s361 = ssub.s32 16, 16
      %362 = vsyncadd [#allocation4], %s361
      %365 = dma.smem_to_hbm [#allocation3], 16, %s6, [#allocation4]
    $region37: #{tpu_custom_call.1} parent=1 // pred_fallthru
      _
    // Predicated region
    $region38: #{tpu_custom_call.1} parent=1 // pred_check
      _
    $region39: #{tpu_custom_call.1} parent=1 // pred_check_branch
      %367 = sbr.rel (0) target = $region41
    $region40: #{tpu_custom_call.1} parent=1 // pred_region
      %368 = dma.done [#allocation4], 16
    $region41: #{tpu_custom_call.1} parent=1 // pred_fallthru
      _
    %369 = sfence
    %370 = vsyncpa [#allocation4], 1

</llo_original>
